<compile_context>
chip_gen: v5e
topology: v5e:2x2
jax: 0.10.0
libtpu: 0.0.40
codegen_flags: <defaults>
</compile_context>

<pallas_src>
import functools

import jax
import jax.numpy as jnp
import numpy as np
from jax.experimental import pallas as pl
from jax.experimental.pallas import tpu as pltpu


def _full_max_2d(x):
    # Keep everything rank-2 (lane reduce, then sublane reduce) -> (1, 1).
    return jnp.max(jnp.max(x, axis=1, keepdims=True), axis=0, keepdims=True)


def _full_sum_2d(x):
    return jnp.sum(jnp.sum(x, axis=1, keepdims=True), axis=0, keepdims=True)


def _pairwise_l2(xr, xc):
    """sqrt(clamp(|xr_i|^2 + |xc_j|^2 - 2 xr_i . xc_j, 1e-12))  -> [tm, tn]."""
    xr = xr.astype(jnp.float32)
    xc = xc.astype(jnp.float32)
    sq_r = jnp.sum(xr * xr, axis=1, keepdims=True)            # [tm, 1]
    sq_c = jnp.sum(xc * xc, axis=1, keepdims=True)            # [tn, 1]
    # Contract on axis 1 of both operands: xr @ xc.T without materializing a
    # transposed copy of xc (keeps the XLU out of the matmul path).  Default
    # precision: single bf16 MXU pass with f32 accumulation (tolerance 5e-2).
    gram = jax.lax.dot_general(
        xr, xc,
        dimension_numbers=(((1,), (1,)), ((), ())),
        preferred_element_type=jnp.float32)                   # [tm, tn]
    # Only the tiny [tn,1]->[1,tn] relayout remains on the XLU.
    d2 = sq_r + jnp.transpose(sq_c) - 2.0 * gram
    return jnp.sqrt(jnp.maximum(d2, 1e-12))


def _max_dist_kernel(erow_ref, ecol_ref, max_ref):
    """Pass 1: global max of the expert-feature pairwise L2 distance matrix."""
    i = pl.program_id(0)
    j = pl.program_id(1)

    @pl.when(jnp.logical_and(i == 0, j == 0))
    def _init():
        # Distances are >= sqrt(1e-12) > 0, so 0 is a safe lower bound.
        max_ref[...] = jnp.zeros_like(max_ref)

    d = _pairwise_l2(erow_ref[...], ecol_ref[...])            # (tm, tn)
    max_ref[...] = jnp.maximum(max_ref[...], _full_max_2d(d))


def _loss_kernel(maxd_ref, frow_ref, fcol_ref, erow_ref, ecol_ref,
                 out_ref, m_ref, s_ref, *, temperature, maxdelta, inv_count):
    """Pass 2: streaming log-mean-exp of the loss tiles."""
    i = pl.program_id(0)
    j = pl.program_id(1)
    first = jnp.logical_and(i == 0, j == 0)
    last = jnp.logical_and(i == pl.num_programs(0) - 1,
                           j == pl.num_programs(1) - 1)

    @pl.when(first)
    def _init():
        m_ref[...] = jnp.full_like(m_ref, -jnp.inf)   # running max of loss
        s_ref[...] = jnp.zeros_like(s_ref)            # running sum of exp(loss - m)

    inv_maxd = 1.0 / maxd_ref[...]                    # (1, 1)

    de = _pairwise_l2(erow_ref[...], ecol_ref[...])   # (tm, tn)
    de = de * inv_maxd
    de = (1.0 - de) ** 2

    dn = _pairwise_l2(frow_ref[...], fcol_ref[...])   # (tm, tn)

    loss = (1.0 - de) * maxdelta - dn
    loss = loss * loss * (1.0 / temperature)

    # Streaming log-sum-exp update — all vector ops; exp/log run on the EUP.
    m_old = m_ref[...]
    m_new = jnp.maximum(m_old, _full_max_2d(loss))
    s_ref[...] = (s_ref[...] * jnp.exp(m_old - m_new)
                  + _full_sum_2d(jnp.exp(loss - m_new)))
    m_ref[...] = m_new

    @pl.when(last)
    def _finalize():
        # log(mean(exp(loss))) * T == (m + log(sum(exp(loss - m)) / N^2)) * T
        out_ref[...] = (m_ref[...] + jnp.log(s_ref[...] * inv_count)) * temperature


def _pick_tile(n):
    # 256-aligned tiles keep the v6e/v7x MXU (2x256x256) full; 128 also matches
    # the v5e (4x128x128) MXU.  Fall back to the full N for small batches.
    for t in (512, 256, 128, 64, 32, 16, 8):
        if n % t == 0:
            return t
    return n


def expert_cl_loss(feature, exp_feature, temperature=1.0, maxdelta=1.0):
    """JAX wrapper mirroring ExpertCLLoos.forward (l2 similarity)."""
    n, d_feat = feature.shape
    exp_flat = exp_feature.reshape(n, -1)              # flatten(start_dim=1)
    d_exp = exp_flat.shape[1]

    tile = _pick_tile(n)
    grid = (n // tile, n // tile)

    # The scalar accumulators carried across grid steps make this a pure
    # sequential reduction -> both axes "arbitrary".
    # TODO(synk): emit per-core partial (m, s) outputs + a tiny final reduce so
    # one N-tile axis can be "parallel" on v7x's two TensorCores.
    cp = pltpu.CompilerParams(
        dimension_semantics=("arbitrary", "arbitrary"),
        vmem_limit_bytes=64 * 1024 * 1024,   # sized against v7x's 64 MiB VMEM
    )

    row = lambda i, j: (i, 0)
    col = lambda i, j: (j, 0)
    fix = lambda i, j: (0, 0)

    # Pass 1: max(dist_exp) as a (1, 1) scalar.
    max_dist = pl.pallas_call(
        _max_dist_kernel,
        out_shape=jax.ShapeDtypeStruct((1, 1), jnp.float32),
        grid_spec=pltpu.PrefetchScalarGridSpec(
            num_scalar_prefetch=0,
            grid=grid,
            in_specs=[
                pl.BlockSpec((tile, d_exp), row),      # expert rows
                pl.BlockSpec((tile, d_exp), col),      # expert cols
            ],
            out_specs=pl.BlockSpec((1, 1), fix),
        ),
        compiler_params=cp,
    )(exp_flat, exp_flat)

    # Pass 2: tiled, streaming log-mean-exp of the loss matrix.
    kernel = functools.partial(
        _loss_kernel,
        temperature=float(temperature),
        maxdelta=float(maxdelta),
        inv_count=1.0 / float(n * n),
    )
    out = pl.pallas_call(
        kernel,
        out_shape=jax.ShapeDtypeStruct((1, 1), jnp.float32),
        grid_spec=pltpu.PrefetchScalarGridSpec(
            num_scalar_prefetch=0,
            grid=grid,
            in_specs=[
                pl.BlockSpec((1, 1), fix),             # max(dist_exp)
                pl.BlockSpec((tile, d_feat), row),     # feature rows
                pl.BlockSpec((tile, d_feat), col),     # feature cols
                pl.BlockSpec((tile, d_exp), row),      # expert rows
                pl.BlockSpec((tile, d_exp), col),      # expert cols
            ],
            out_specs=pl.BlockSpec((1, 1), fix),
            scratch_shapes=[
                pltpu.VMEM((1, 1), jnp.float32),       # running max m
                pltpu.VMEM((1, 1), jnp.float32),       # running sum s
            ],
        ),
        compiler_params=cp,
    )(max_dist, feature, feature, exp_flat, exp_flat)
    return out[0, 0]


def _reference(feature, exp_feature, temperature=1.0, maxdelta=1.0):
    """Pure-numpy reference mirroring the torch module (f64 baseline)."""
    feature = np.asarray(feature, np.float64)
    exp_flat = np.asarray(exp_feature, np.float64).reshape(feature.shape[0], -1)

    def l2(x):
        sq = (x ** 2).sum(1, keepdims=True)
        d = sq + sq.T - 2.0 * (x @ x.T)
        return np.sqrt(np.clip(d, 1e-12, None))

    de = l2(exp_flat)
    de = de / de.max()
    de = (1.0 - de) ** 2
    dn = l2(feature)
    loss = ((1.0 - de) * maxdelta - dn) ** 2 / temperature
    loss = np.exp(loss).mean()
    return float(np.log(loss) * temperature)


if __name__ == "__main__":
    key = jax.random.PRNGKey(0)
    k1, k2 = jax.random.split(key)

    # feature is already [N, D]; exp_feature is a conv-style NCHW tensor
    # flattened inside forward().
    feature = jax.random.normal(k1, (8, 32), dtype=jnp.float32)           # [N, D_feat]
    exp_feature = jax.random.normal(k2, (8, 4, 8, 8), dtype=jnp.float32)  # [N, C, H, W]

    out = expert_cl_loss(feature, exp_feature, temperature=1.0, maxdelta=1.0)
    out = jax.block_until_ready(out)

    ref = _reference(feature, exp_feature, temperature=1.0, maxdelta=1.0)
    assert np.allclose(np.asarray(out), ref, rtol=5e-2, atol=5e-2), (out, ref)

    print("KERNEL_OK")
</pallas_src>

<mosaic_0001>
module attributes {stable_mosaic.version = 11 : i64} {
  func.func @_max_dist_kernel(%arg0: i32, %arg1: i32, %arg2: memref<8x256xf32, #tpu.memory_space<vmem>>, %arg3: memref<8x256xf32, #tpu.memory_space<vmem>>, %arg4: memref<1x1xf32, #tpu.memory_space<vmem>>) attributes {dimension_semantics = [#tpu.dimension_semantics<arbitrary>, #tpu.dimension_semantics<arbitrary>], iteration_bounds = array<i64: 1, 1>, scalar_prefetch = 0 : i64, scratch_operands = 0 : i64, tpu.core_type = #tpu.core_type<tc>, window_params = [{transform_indices = @transform_0, window_bounds = array<i64: 8, 256>}, {transform_indices = @transform_1, window_bounds = array<i64: 8, 256>}, {pipeline_mode = #tpu.pipeline_mode<synchronous>, transform_indices = @transform_2, window_bounds = array<i64: 1, 1>}]} {
    %c0_i32 = arith.constant 0 : i32
    %0 = arith.cmpi eq, %arg0, %c0_i32 : i32
    %c0_i32_0 = arith.constant 0 : i32
    %1 = arith.cmpi eq, %arg1, %c0_i32_0 : i32
    %2 = arith.andi %0, %1 : i1
    %3 = arith.extui %2 : i1 to i32
    %c0_i32_1 = arith.constant 0 : i32
    %4 = arith.cmpi ne, %3, %c0_i32_1 : i32
    scf.if %4 {
      %cst_15 = arith.constant 0.000000e+00 : f32
      %31 = vector.broadcast %cst_15 : f32 to vector<1x1xf32>
      %c0_16 = arith.constant 0 : index
      %c0_17 = arith.constant 0 : index
      %32 = vector.load %arg4[%c0_16, %c0_17] : memref<1x1xf32, #tpu.memory_space<vmem>>, vector<1x1xf32>
      tpu.vector_store %arg4[%c0_16, %c0_17], %31 {strides = array<i32>} : memref<1x1xf32, #tpu.memory_space<vmem>>, vector<1x1xf32>,
    } else {
    }
    %c0 = arith.constant 0 : index
    %c0_2 = arith.constant 0 : index
    %5 = vector.load %arg2[%c0, %c0_2] : memref<8x256xf32, #tpu.memory_space<vmem>>, vector<8x256xf32>
    %c0_3 = arith.constant 0 : index
    %c0_4 = arith.constant 0 : index
    %6 = vector.load %arg3[%c0_3, %c0_4] : memref<8x256xf32, #tpu.memory_space<vmem>>, vector<8x256xf32>
    %7 = arith.mulf %5, %5 : vector<8x256xf32>
    %cst = arith.constant dense<0.000000e+00> : vector<8xf32>
    %8 = vector.multi_reduction <add>, %7, %cst [1] : vector<8x256xf32> to vector<8xf32>
    %9 = vector.shape_cast %8 : vector<8xf32> to vector<8x1xf32>
    %10 = arith.mulf %6, %6 : vector<8x256xf32>
    %cst_5 = arith.constant dense<0.000000e+00> : vector<8xf32>
    %11 = vector.multi_reduction <add>, %10, %cst_5 [1] : vector<8x256xf32> to vector<8xf32>
    %12 = vector.shape_cast %11 : vector<8xf32> to vector<8x1xf32>
    %cst_6 = arith.constant dense<0.000000e+00> : vector<8x8xf32>
    %13 = tpu.matmul %5, %6, %cst_6 {dimension_numbers = #tpu.dot_dimension_numbers<[1], [1], [0], [0], [0, 0, 1, 0], [], []>} : vector<8x256xf32>, vector<8x256xf32>, vector<8x8xf32> -> vector<8x8xf32>
    %14 = tpu.transpose %12, [1, 0] : vector<8x1xf32> -> vector<1x8xf32>
    %15 = vector.broadcast %9 : vector<8x1xf32> to vector<8x8xf32>
    %16 = vector.broadcast %14 : vector<1x8xf32> to vector<8x8xf32>
    %17 = arith.addf %15, %16 : vector<8x8xf32>
    %cst_7 = arith.constant 2.000000e+00 : f32
    %18 = vector.broadcast %cst_7 : f32 to vector<8x8xf32>
    %19 = arith.mulf %18, %13 : vector<8x8xf32>
    %20 = arith.subf %17, %19 : vector<8x8xf32>
    %cst_8 = arith.constant 9.99999996E-13 : f32
    %21 = vector.broadcast %cst_8 : f32 to vector<8x8xf32>
    %22 = arith.maximumf %20, %21 : vector<8x8xf32>
    %23 = math.sqrt %22 : vector<8x8xf32>
    %c0_9 = arith.constant 0 : index
    %c0_10 = arith.constant 0 : index
    %24 = vector.load %arg4[%c0_9, %c0_10] : memref<1x1xf32, #tpu.memory_space<vmem>>, vector<1x1xf32>
    %cst_11 = arith.constant dense<0xFF800000> : vector<8xf32>
    %25 = vector.multi_reduction <maximumf>, %23, %cst_11 [1] : vector<8x8xf32> to vector<8xf32>
    %26 = vector.shape_cast %25 : vector<8xf32> to vector<8x1xf32>
    %cst_12 = arith.constant dense<0xFF800000> : vector<1xf32>
    %27 = vector.multi_reduction <maximumf>, %26, %cst_12 [0] : vector<8x1xf32> to vector<1xf32>
    %28 = vector.shape_cast %27 : vector<1xf32> to vector<1x1xf32>
    %29 = arith.maximumf %24, %28 : vector<1x1xf32>
    %c0_13 = arith.constant 0 : index
    %c0_14 = arith.constant 0 : index
    %30 = vector.load %arg4[%c0_13, %c0_14] : memref<1x1xf32, #tpu.memory_space<vmem>>, vector<1x1xf32>
    tpu.vector_store %arg4[%c0_13, %c0_14], %29 {strides = array<i32>} : memref<1x1xf32, #tpu.memory_space<vmem>>, vector<1x1xf32>,
    return
  }
  func.func @transform_0(%arg0: i32, %arg1: i32) -> (i32, i32) {
    %c0_i32 = arith.constant 0 : i32
    %c0_i32_0 = arith.constant 0 : i32
    return %arg0, %c0_i32 : i32, i32
  }
  func.func @transform_1(%arg0: i32, %arg1: i32) -> (i32, i32) {
    %c0_i32 = arith.constant 0 : i32
    %c0_i32_0 = arith.constant 0 : i32
    return %arg1, %c0_i32 : i32, i32
  }
  func.func @transform_2(%arg0: i32, %arg1: i32) -> (i32, i32) {
    %c0_i32 = arith.constant 0 : i32
    %c0_i32_0 = arith.constant 0 : i32
    %c0_i32_1 = arith.constant 0 : i32
    return %c0_i32, %c0_i32_0 : i32, i32
  }
}

</mosaic_0001>

<llo_original>
// kernel: tpu_custom_call.1
$region0: #{tpu_custom_call.1}
  #allocation0 [shape = 'u32[]', space=smem, size = 0x4, offset = 0x4, fixed_abs, tag = 'smem constant byte address 0x4 - core index']
  #allocation1 [shape = 'u32[72,128]{1,0:T(1,128)}', space=vmem, size = 0x9000, scoped, tag = 'internal scratch']
  %s0 = inlined_call_operand.hbm [shape: f32[8,256], index: 0, kind: input, shape index: {}]
  %s1 = inlined_call_operand.hbm [shape: f32[8,256], index: 1, kind: input, shape index: {}]
  %s2 = inlined_call_operand.hbm [shape: f32[1,1], index: 2, kind: output, shape index: {}]
  %s3 = sld [smem:[#allocation0]]
  $region30: #{tpu_custom_call.1} parent=0
    _
  %s5 = ssub.s32 1, %s3
  %s6 = scalar_select 0, %s5, %s3
  $region1: #{tpu_custom_call.1} parent=0
    #allocation2 [shape = 'u8[8192]{0}', space=vmem, size = 0x2000, scoped, tag = 'input window, operand 0, single buffered']
    #allocation3 [shape = 's32[1]{0}', space=sflag, size = 0x4, scoped, tag = 'scoped memory for tpu_custom_call.1']
    #allocation4 [shape = 's32[1]{0}', space=sflag, size = 0x4, scoped, tag = 'scoped memory for tpu_custom_call.1']
    #allocation5 [shape = 'u8[8192]{0}', space=vmem, size = 0x2000, scoped, tag = 'input window, operand 1, single buffered']
    #allocation6 [shape = 's32[1]{0}', space=sflag, size = 0x4, scoped, tag = 'scoped memory for tpu_custom_call.1']
    #allocation7 [shape = 'u8[512]{0}', space=vmem, size = 0x400, scoped, tag = 'output window, operand 0, single buffered']
    %7 = vsyncpa [#allocation3], 0
    %8 = vsyncpa [#allocation6], 0
    %9 = vsyncpa [#allocation4], 0
    // Predicated region
    $region2: #{tpu_custom_call.1} parent=1 // pred_check
      _
    $region3: #{tpu_custom_call.1} parent=1 // pred_check_branch
      %11 = sbr.rel (0) target = $region5
    $region4: #{tpu_custom_call.1} parent=1 // pred_region
      %13 = vsyncadd [#allocation3], 0
      %s15 = sshll.u32 %s0, 4
      %s16 = int_to_ptr.hbm [resolvable:$true] %s15
      %s17 = sshll.u32 [#allocation2], 4
      %s18 = int_to_ptr.vmem [resolvable:$true] %s17
      %20 = dma.hbm_to_vmem [thread:$0]  %s16, 256, %s18, [#allocation3]
    $region5: #{tpu_custom_call.1} parent=1 // pred_fallthru
      _
    // Predicated region
    $region6: #{tpu_custom_call.1} parent=1 // pred_check
      _
    $region7: #{tpu_custom_call.1} parent=1 // pred_check_branch
      %22 = sbr.rel (0) target = $region9
    $region8: #{tpu_custom_call.1} parent=1 // pred_region
      %24 = vsyncadd [#allocation6], 0
      %s26 = sshll.u32 %s1, 4
      %s27 = int_to_ptr.hbm [resolvable:$true] %s26
      %s28 = sshll.u32 [#allocation5], 4
      %s29 = int_to_ptr.vmem [resolvable:$true] %s28
      %31 = dma.hbm_to_vmem [thread:$0]  %s27, 256, %s29, [#allocation6]
    $region9: #{tpu_custom_call.1} parent=1 // pred_fallthru
      _
    // Predicated region
    $region10: #{tpu_custom_call.1} parent=1 // pred_check
      _
    $region11: #{tpu_custom_call.1} parent=1 // pred_check_branch
      %33 = sbr.rel (0) target = $region13
    $region12: #{tpu_custom_call.1} parent=1 // pred_region
      %35 = dma.done [#allocation3], 256
    $region13: #{tpu_custom_call.1} parent=1 // pred_fallthru
      _
    // Predicated region
    $region14: #{tpu_custom_call.1} parent=1 // pred_check
      _
    $region15: #{tpu_custom_call.1} parent=1 // pred_check_branch
      %37 = sbr.rel (0) target = $region17
    $region16: #{tpu_custom_call.1} parent=1 // pred_region
      %39 = dma.done [#allocation6], 256
    $region17: #{tpu_custom_call.1} parent=1 // pred_fallthru
      _
    %p40 = scmp.eq.s32.totalorder 0, 0
    %p41 = scmp.eq.s32.totalorder 0, 0
    %p42 = pnand %p40, %p41
    %p43 = pneg %p42
    // Predicated region
    $region18: #{tpu_custom_call.1} parent=1 // pred_check
      _
    $region19: #{tpu_custom_call.1} parent=1 // pred_check_branch
      %45 = sbr.rel (%p42) target = $region21
    $region20: #{tpu_custom_call.1} parent=1 // pred_region
      %vm46 = vcmask 0
      %47 = vst.msk [vmem:[#allocation7] sm:$0x1] %vm46, 0.0
    $region21: #{tpu_custom_call.1} parent=1 // pred_fallthru
      _
    %v48 = vld [vmem:[#allocation2] sm:$0xff]
    %v49 = vld [vmem:[#allocation2 + $0x8] sm:$0xff]
    %v50 = vld [vmem:[#allocation5] sm:$0xff]
    %v51 = vld [vmem:[#allocation5 + $0x8] sm:$0xff]
    %v52 = vmul.f32 %v48, %v48
    %v53 = vmul.f32 %v49, %v49
    %v54 = vadd.f32 %v52, %v53
    %55 = vadd.xlane.f32.xlu0 %v54
    %v56 = vpop.xlane.xlu0 %55
    %v57 = vmul.f32 %v50, %v50
    %v58 = vmul.f32 %v51, %v51
    %v59 = vadd.f32 %v57, %v58
    %60 = vadd.xlane.f32.xlu0 %v59
    %v61 = vpop.xlane.xlu0 %60
    %62 = vmatpush.xpose.msra.mxu0 0.0
    %63 = vmatpush.xpose.msra.mxu0 0.0
    %64 = vmatpush.xpose.msra.mxu0 0.0
    %65 = vmatpush.xpose.msra.mxu0 0.0
    %66 = vmatpush.xpose.msra.mxu0 0.0
    %67 = vmatpush.xpose.msra.mxu0 0.0
    %68 = vmatpush.xpose.msra.mxu0 0.0
    %69 = vmatpush.xpose.msra.mxu0 0.0
    %70 = vmatpush.xpose.msra.mxu0 0.0
    %71 = vmatpush.xpose.msra.mxu0 0.0
    %72 = vmatpush.xpose.msra.mxu0 0.0
    %73 = vmatpush.xpose.msra.mxu0 0.0
    %74 = vmatpush.xpose.msra.mxu0 0.0
    %75 = vmatpush.xpose.msra.mxu0 0.0
    %76 = vmatpush.xpose.msra.mxu0 0.0
    %77 = vmatpush.xpose.msra.mxu0 %v50
    %78 = vmatmul.f32.gmra.mxu0 %v48
    %v79 = vpop.f32.mrf.mxu0
    %v80 = vadd.f32 0.0, %v79
    %81 = vdwg.mxu0
    %82 = vmatpush.xpose.msra.mxu0 0.0
    %83 = vmatpush.xpose.msra.mxu0 0.0
    %84 = vmatpush.xpose.msra.mxu0 0.0
    %85 = vmatpush.xpose.msra.mxu0 0.0
    %86 = vmatpush.xpose.msra.mxu0 0.0
    %87 = vmatpush.xpose.msra.mxu0 0.0
    %88 = vmatpush.xpose.msra.mxu0 0.0
    %89 = vmatpush.xpose.msra.mxu0 0.0
    %90 = vmatpush.xpose.msra.mxu0 0.0
    %91 = vmatpush.xpose.msra.mxu0 0.0
    %92 = vmatpush.xpose.msra.mxu0 0.0
    %93 = vmatpush.xpose.msra.mxu0 0.0
    %94 = vmatpush.xpose.msra.mxu0 0.0
    %95 = vmatpush.xpose.msra.mxu0 0.0
    %96 = vmatpush.xpose.msra.mxu0 0.0
    %97 = vmatpush.xpose.msra.mxu0 %v51
    %98 = vmatmul.f32.gmra.mxu0 %v49
    %v99 = vpop.f32.mrf.mxu0
    %v100 = vadd.f32 %v80, %v99
    %101 = vdwg.mxu0
    %102 = vxpose.xlu0.b32.start [1/16] %v61, 128
    %103 = vxpose.xlu0.b32.cont [2/16] 0.0, 128
    %104 = vxpose.xlu0.b32.cont [3/16] 0.0, 128
    %105 = vxpose.xlu0.b32.cont [4/16] 0.0, 128
    %106 = vxpose.xlu0.b32.cont [5/16] 0.0, 128
    %107 = vxpose.xlu0.b32.cont [6/16] 0.0, 128
    %108 = vxpose.xlu0.b32.cont [7/16] 0.0, 128
    %109 = vxpose.xlu0.b32.cont [8/16] 0.0, 128
    %110 = vxpose.xlu0.b32.cont [9/16] 0.0, 128
    %111 = vxpose.xlu0.b32.cont [10/16] 0.0, 128
    %112 = vxpose.xlu0.b32.cont [11/16] 0.0, 128
    %113 = vxpose.xlu0.b32.cont [12/16] 0.0, 128
    %114 = vxpose.xlu0.b32.cont [13/16] 0.0, 128
    %115 = vxpose.xlu0.b32.cont [14/16] 0.0, 128
    %116 = vxpose.xlu0.b32.cont [15/16] 0.0, 128
    %117 = vxpose.xlu0.b32.end [16/16] 0.0, 128
    %v118 = vpop.trf.xlu0
    %v119 = vpop.trf.xlu0
    %v120 = vpop.trf.xlu0
    %v121 = vpop.trf.xlu0
    %v122 = vpop.trf.xlu0
    %v123 = vpop.trf.xlu0
    %v124 = vpop.trf.xlu0
    %v125 = vpop.trf.xlu0
    %v126 = vpop.trf.xlu0
    %v127 = vpop.trf.xlu0
    %v128 = vpop.trf.xlu0
    %v129 = vpop.trf.xlu0
    %v130 = vpop.trf.xlu0
    %v131 = vpop.trf.xlu0
    %v132 = vpop.trf.xlu0
    %v133 = vpop.trf.xlu0
    %v134 = vperm.slane %v118, 0
    %v135 = vadd.f32 %v56, %v134
    %v136 = vmul.f32 %v100, 2.0
    %v137 = vsub.f32 %v135, %v136
    %v138 = vmax.f32 %v137, 1e-12
    %v139 = vrsqrt.pop %v138
    %v140 = vmul.f32 %v139, %v138
    %v141 = vmul.f32 %v140, %v139
    %v142 = vmul.f32 0.5, %v141
    %v143 = vsub.f32 1.5, %v142
    %v144 = vmul.f32 %v139, %v143
    %v145 = vmul.f32 %v138, %v144
    %vm146 = vcmp.eq.f32.partialorder %v138, inf
    %v147 = vsel %vm146, %v138, %v145
    %vm148 = vcmp.eq.f32.partialorder %v138, 0.0
    %v149 = vand.u32 %v138, 2147483648
    %v150 = vsel %vm148, %v149, %v147
    %v151 = vld [vmem:[#allocation7] sm:$0x1]
    %vm152 = vcmask 64512
    %v153 = vsel %vm152, %v150, -inf
    %154 = vmax.xlane.f32.xlu0 %v153
    %v155 = vpop.xlane.xlu0 %154
    %v156 = vrot.slane %v155, 4
    %v157 = vmax.f32 %v155, %v156
    %v158 = vrot.slane %v157, 2
    %v159 = vmax.f32 %v157, %v158
    %v160 = vrot.slane %v159, 1
    %v161 = vmax.f32 %v159, %v160
    %v162 = vmax.f32 %v151, %v161
    %vm163 = vcmask 0
    %164 = vst.msk [vmem:[#allocation7] sm:$0x1] %vm163, %v162
    // Predicated region
    $region22: #{tpu_custom_call.1} parent=1 // pred_check
      _
    $region23: #{tpu_custom_call.1} parent=1 // pred_check_branch
      %166 = sbr.rel (0) target = $region25
    $region24: #{tpu_custom_call.1} parent=1 // pred_region
      %168 = vsyncadd [#allocation4], 0
      %s170 = sshll.u32 [#allocation7], 4
      %s171 = int_to_ptr.vmem [resolvable:$true] %s170
      %s172 = sshll.u32 %s2, 4
      %s173 = int_to_ptr.hbm [resolvable:$true] %s172
      %175 = dma.vmem_to_hbm [thread:$0]  %s171, 16, %s173, [#allocation4]
    $region25: #{tpu_custom_call.1} parent=1 // pred_fallthru
      _
    // Predicated region
    $region26: #{tpu_custom_call.1} parent=1 // pred_check
      _
    $region27: #{tpu_custom_call.1} parent=1 // pred_check_branch
      %177 = sbr.rel (0) target = $region29
    $region28: #{tpu_custom_call.1} parent=1 // pred_region
      %179 = dma.done [#allocation4], 16
    $region29: #{tpu_custom_call.1} parent=1 // pred_fallthru
      _
    %180 = vsyncpa [#allocation3], 1
    %181 = vsyncpa [#allocation6], 1
    %182 = vsyncpa [#allocation4], 1

</llo_original>
